<compile_context>
chip_gen: v7x
topology: tpu7x:2x2x1
jax: 0.10.0
libtpu: 0.0.40
codegen_flags: <defaults>
</compile_context>

<pallas_src>
import jax
import jax.numpy as jnp
from jax.experimental import pallas as pl
from jax.experimental.pallas import tpu as pltpu


def _landmark_encoder_kernel(x_ref, w1_ref, b1_ref, w2_ref, b2_ref,
                             gamma_ref, beta_ref, o_ref, xp_ref):
    # x_ref: (TM, K=262)   w1: (Kp=384, H)   b1: (1, H)
    # w2: (H, D)           b2/gamma/beta: (1, D)
    # xp_ref: (TM, Kp) VMEM scratch used to lane-pad the x tile to a
    #         128-multiple before hitting the MXU.
    tm, k = x_ref.shape
    kp = xp_ref.shape[-1]

    if kp > k:
        pad_from = (k // 128) * 128          # 256: largest aligned prefix
        # Zero the padded tail every step (scratch persists across steps and
        # across megacore shards; explicit zeros avoid NaN-garbage * 0 = NaN).
        xp_ref[:, pad_from:] = jnp.zeros((tm, kp - pad_from), xp_ref.dtype)
        xp_ref[:, :k] = x_ref[...]           # masked store of the 262 real cols
        x = xp_ref[...]                      # (TM, Kp), lane-aligned
    else:
        x = x_ref[...]

    # Linear 1 + ReLU (MXU, f32 accumulate).  w1 rows >= 262 are zero.
    h = jnp.dot(x, w1_ref[...], preferred_element_type=jnp.float32) + b1_ref[...]
    h = jnp.maximum(h, 0.0)

    # Linear 2
    y = jnp.dot(h, w2_ref[...], preferred_element_type=jnp.float32) + b2_ref[...]

    # LayerNorm over last dim (PyTorch default: biased variance, eps=1e-5).
    inv_d = 1.0 / y.shape[-1]
    mean = jnp.sum(y, axis=-1, keepdims=True) * inv_d
    centered = y - mean
    var = jnp.sum(centered * centered, axis=-1, keepdims=True) * inv_d
    inv = jax.lax.rsqrt(var + 1e-5)
    o_ref[...] = (centered * inv * gamma_ref[...] + beta_ref[...]).astype(o_ref.dtype)


def landmark_encoder_forward(x, w1, b1, w2, b2, gamma, beta, *, tm=1024):
    """x: (B, T, L, 2) float32. Returns (B, T, output_dim)."""
    B, T, L, C = x.shape
    M = B * T
    K = L * C                      # 262
    H = w1.shape[1]
    D = w2.shape[1]

    x_flat = x.reshape(M, K)       # streamed unpadded: no extra HBM pass over x

    # Pad only w1 (tiny, one-time) so the MXU contraction is a clean 384.
    K_pad = pl.cdiv(K, 128) * 128
    w1p = jnp.pad(w1, ((0, K_pad - K), (0, 0))) if K_pad != K else w1

    # Row tile: multiple of 8, capped at `tm`, and chosen so the grid keeps
    # >= 2 steps (both v7x TensorCores get work; pipelining stays active).
    def _round8(n):
        return ((n + 7) // 8) * 8
    TM = min(tm, max(8, _round8(pl.cdiv(M, 2))))
    grid = (pl.cdiv(M, TM),)

    b1_2d = b1.reshape(1, H)
    b2_2d = b2.reshape(1, D)
    gamma_2d = gamma.reshape(1, D)
    beta_2d = beta.reshape(1, D)

    cost = pl.CostEstimate(
        flops=2 * M * (K_pad * H + H * D),
        transcendentals=0,
        bytes_accessed=4 * (M * (K + D) + K_pad * H + H * D + 2 * H + 3 * D),
    )

    out_flat = pl.pallas_call(
        _landmark_encoder_kernel,
        out_shape=jax.ShapeDtypeStruct((M, D), jnp.float32),
        grid=grid,
        in_specs=[
            pl.BlockSpec((TM, K), lambda i: (i, 0)),       # x tile (pipelined, unpadded)
            pl.BlockSpec((K_pad, H), lambda i: (0, 0)),    # w1 padded (resident)
            pl.BlockSpec((1, H), lambda i: (0, 0)),        # b1 (resident)
            pl.BlockSpec((H, D), lambda i: (0, 0)),        # w2 (resident)
            pl.BlockSpec((1, D), lambda i: (0, 0)),        # b2 (resident)
            pl.BlockSpec((1, D), lambda i: (0, 0)),        # gamma (resident)
            pl.BlockSpec((1, D), lambda i: (0, 0)),        # beta (resident)
        ],
        out_specs=pl.BlockSpec((TM, D), lambda i: (i, 0)),
        scratch_shapes=[pltpu.VMEM((TM, K_pad), jnp.float32)],
        compiler_params=pltpu.CompilerParams(
            dimension_semantics=("parallel",)),
        cost_estimate=cost,
    )(x_flat, w1p, b1_2d, w2, b2_2d, gamma_2d, beta_2d)

    return out_flat.reshape(B, T, D)


def init_params(key, input_size, hidden_dim, output_dim):
    k1, k2, k3, k4 = jax.random.split(key, 4)
    # Deterministic init (uniform, PyTorch-Linear-like bounds).
    bound1 = 1.0 / (input_size ** 0.5)
    bound2 = 1.0 / (hidden_dim ** 0.5)
    w1 = jax.random.uniform(k1, (input_size, hidden_dim), jnp.float32, -bound1, bound1)
    b1 = jax.random.uniform(k2, (hidden_dim,), jnp.float32, -bound1, bound1)
    w2 = jax.random.uniform(k3, (hidden_dim, output_dim), jnp.float32, -bound2, bound2)
    b2 = jax.random.uniform(k4, (output_dim,), jnp.float32, -bound2, bound2)
    gamma = jnp.ones((output_dim,), jnp.float32)
    beta = jnp.zeros((output_dim,), jnp.float32)
    return w1, b1, w2, b2, gamma, beta


if __name__ == "__main__":
    # Small, module-consistent shapes: batch=2, seq=8, landmarks=(131, 2)
    B, T = 2, 8
    INPUT_DIM = (131, 2)
    HIDDEN_DIM = 256
    OUTPUT_DIM = 256
    input_size = INPUT_DIM[0] * INPUT_DIM[1]

    key = jax.random.PRNGKey(0)
    kx, kp = jax.random.split(key)
    x = jax.random.normal(kx, (B, T, INPUT_DIM[0], INPUT_DIM[1]), jnp.float32)
    params = init_params(kp, input_size, HIDDEN_DIM, OUTPUT_DIM)

    out = landmark_encoder_forward(x, *params)
    jax.block_until_ready(out)

    # Reference check in plain JAX.
    w1, b1, w2, b2, gamma, beta = params
    xf = x.reshape(B, T, -1)
    h = jnp.maximum(xf @ w1 + b1, 0.0)
    y = h @ w2 + b2
    mu = jnp.mean(y, axis=-1, keepdims=True)
    var = jnp.mean((y - mu) ** 2, axis=-1, keepdims=True)
    ref = (y - mu) / jnp.sqrt(var + 1e-5) * gamma + beta

    assert out.shape == (B, T, OUTPUT_DIM)
    assert jnp.allclose(out, ref, atol=1e-4, rtol=1e-4)
    print("KERNEL_OK")
</pallas_src>

<mosaic_0001>
module attributes {stable_mosaic.version = 11 : i64} {
  func.func @_landmark_encoder_kernel(%arg0: i32, %arg1: memref<8x262xf32, #tpu.memory_space<vmem>>, %arg2: memref<384x256xf32, #tpu.memory_space<vmem>>, %arg3: memref<1x256xf32, #tpu.memory_space<vmem>>, %arg4: memref<256x256xf32, #tpu.memory_space<vmem>>, %arg5: memref<1x256xf32, #tpu.memory_space<vmem>>, %arg6: memref<1x256xf32, #tpu.memory_space<vmem>>, %arg7: memref<1x256xf32, #tpu.memory_space<vmem>>, %arg8: memref<8x256xf32, #tpu.memory_space<vmem>>, %arg9: memref<8x384xf32, #tpu.memory_space<vmem>>) attributes {dimension_semantics = [#tpu.dimension_semantics<parallel>], iteration_bounds = array<i64: 2>, scalar_prefetch = 0 : i64, scratch_operands = 1 : i64, tpu.core_type = #tpu.core_type<tc>, window_params = [{transform_indices = @transform_0, window_bounds = array<i64: 8, 262>}, {pipeline_mode = #tpu.pipeline_mode<synchronous>, transform_indices = @transform_1, window_bounds = array<i64: 384, 256>}, {pipeline_mode = #tpu.pipeline_mode<synchronous>, transform_indices = @transform_2, window_bounds = array<i64: 1, 256>}, {pipeline_mode = #tpu.pipeline_mode<synchronous>, transform_indices = @transform_3, window_bounds = array<i64: 256, 256>}, {pipeline_mode = #tpu.pipeline_mode<synchronous>, transform_indices = @transform_4, window_bounds = array<i64: 1, 256>}, {pipeline_mode = #tpu.pipeline_mode<synchronous>, transform_indices = @transform_5, window_bounds = array<i64: 1, 256>}, {pipeline_mode = #tpu.pipeline_mode<synchronous>, transform_indices = @transform_6, window_bounds = array<i64: 1, 256>}, {transform_indices = @transform_7, window_bounds = array<i64: 8, 256>}]} {
    %cst = arith.constant 0.000000e+00 : f32
    %0 = vector.broadcast %cst : f32 to vector<8x128xf32>
    %c0 = arith.constant 0 : index
    %c256 = arith.constant 256 : index
    %1 = vector.load %arg9[%c0, %c256] : memref<8x384xf32, #tpu.memory_space<vmem>>, vector<8x128xf32>
    tpu.vector_store %arg9[%c0, %c256], %0 {strides = array<i32>} : memref<8x384xf32, #tpu.memory_space<vmem>>, vector<8x128xf32>,
    %c0_0 = arith.constant 0 : index
    %c0_1 = arith.constant 0 : index
    %2 = vector.load %arg1[%c0_0, %c0_1] : memref<8x262xf32, #tpu.memory_space<vmem>>, vector<8x262xf32>
    %c0_2 = arith.constant 0 : index
    %c0_3 = arith.constant 0 : index
    %3 = vector.load %arg9[%c0_2, %c0_3] : memref<8x384xf32, #tpu.memory_space<vmem>>, vector<8x262xf32>
    tpu.vector_store %arg9[%c0_2, %c0_3], %2 {strides = array<i32>} : memref<8x384xf32, #tpu.memory_space<vmem>>, vector<8x262xf32>,
    %c0_4 = arith.constant 0 : index
    %c0_5 = arith.constant 0 : index
    %4 = vector.load %arg9[%c0_4, %c0_5] : memref<8x384xf32, #tpu.memory_space<vmem>>, vector<8x384xf32>
    %c0_6 = arith.constant 0 : index
    %c0_7 = arith.constant 0 : index
    %5 = vector.load %arg2[%c0_6, %c0_7] : memref<384x256xf32, #tpu.memory_space<vmem>>, vector<384x256xf32>
    %cst_8 = arith.constant dense<0.000000e+00> : vector<8x256xf32>
    %6 = tpu.matmul %4, %5, %cst_8 {dimension_numbers = #tpu.dot_dimension_numbers<[1], [0], [0], [1], [0, 0, 1, 1], [], []>} : vector<8x384xf32>, vector<384x256xf32>, vector<8x256xf32> -> vector<8x256xf32>
    %c0_9 = arith.constant 0 : index
    %c0_10 = arith.constant 0 : index
    %7 = vector.load %arg3[%c0_9, %c0_10] : memref<1x256xf32, #tpu.memory_space<vmem>>, vector<1x256xf32>
    %8 = vector.broadcast %7 : vector<1x256xf32> to vector<8x256xf32>
    %9 = arith.addf %6, %8 : vector<8x256xf32>
    %cst_11 = arith.constant 0.000000e+00 : f32
    %10 = vector.broadcast %cst_11 : f32 to vector<8x256xf32>
    %11 = arith.maximumf %9, %10 : vector<8x256xf32>
    %c0_12 = arith.constant 0 : index
    %c0_13 = arith.constant 0 : index
    %12 = vector.load %arg4[%c0_12, %c0_13] : memref<256x256xf32, #tpu.memory_space<vmem>>, vector<256x256xf32>
    %cst_14 = arith.constant dense<0.000000e+00> : vector<8x256xf32>
    %13 = tpu.matmul %11, %12, %cst_14 {dimension_numbers = #tpu.dot_dimension_numbers<[1], [0], [0], [1], [0, 0, 1, 1], [], []>} : vector<8x256xf32>, vector<256x256xf32>, vector<8x256xf32> -> vector<8x256xf32>
    %c0_15 = arith.constant 0 : index
    %c0_16 = arith.constant 0 : index
    %14 = vector.load %arg5[%c0_15, %c0_16] : memref<1x256xf32, #tpu.memory_space<vmem>>, vector<1x256xf32>
    %15 = vector.broadcast %14 : vector<1x256xf32> to vector<8x256xf32>
    %16 = arith.addf %13, %15 : vector<8x256xf32>
    %cst_17 = arith.constant dense<0.000000e+00> : vector<8xf32>
    %17 = vector.multi_reduction <add>, %16, %cst_17 [1] : vector<8x256xf32> to vector<8xf32>
    %18 = vector.shape_cast %17 : vector<8xf32> to vector<8x1xf32>
    %cst_18 = arith.constant 3.906250e-03 : f32
    %19 = vector.broadcast %cst_18 : f32 to vector<8x1xf32>
    %20 = arith.mulf %18, %19 : vector<8x1xf32>
    %21 = vector.broadcast %20 : vector<8x1xf32> to vector<8x256xf32>
    %22 = arith.subf %16, %21 : vector<8x256xf32>
    %23 = arith.mulf %22, %22 : vector<8x256xf32>
    %cst_19 = arith.constant dense<0.000000e+00> : vector<8xf32>
    %24 = vector.multi_reduction <add>, %23, %cst_19 [1] : vector<8x256xf32> to vector<8xf32>
    %25 = vector.shape_cast %24 : vector<8xf32> to vector<8x1xf32>
    %cst_20 = arith.constant 3.906250e-03 : f32
    %26 = vector.broadcast %cst_20 : f32 to vector<8x1xf32>
    %27 = arith.mulf %25, %26 : vector<8x1xf32>
    %cst_21 = arith.constant 9.99999974E-6 : f32
    %28 = vector.broadcast %cst_21 : f32 to vector<8x1xf32>
    %29 = arith.addf %27, %28 : vector<8x1xf32>
    %30 = math.rsqrt %29 : vector<8x1xf32>
    %31 = vector.broadcast %30 : vector<8x1xf32> to vector<8x256xf32>
    %32 = arith.mulf %22, %31 : vector<8x256xf32>
    %c0_22 = arith.constant 0 : index
    %c0_23 = arith.constant 0 : index
    %33 = vector.load %arg6[%c0_22, %c0_23] : memref<1x256xf32, #tpu.memory_space<vmem>>, vector<1x256xf32>
    %34 = vector.broadcast %33 : vector<1x256xf32> to vector<8x256xf32>
    %35 = arith.mulf %32, %34 : vector<8x256xf32>
    %c0_24 = arith.constant 0 : index
    %c0_25 = arith.constant 0 : index
    %36 = vector.load %arg7[%c0_24, %c0_25] : memref<1x256xf32, #tpu.memory_space<vmem>>, vector<1x256xf32>
    %37 = vector.broadcast %36 : vector<1x256xf32> to vector<8x256xf32>
    %38 = arith.addf %35, %37 : vector<8x256xf32>
    %c0_26 = arith.constant 0 : index
    %c0_27 = arith.constant 0 : index
    %39 = vector.load %arg8[%c0_26, %c0_27] : memref<8x256xf32, #tpu.memory_space<vmem>>, vector<8x256xf32>
    tpu.vector_store %arg8[%c0_26, %c0_27], %38 {strides = array<i32>} : memref<8x256xf32, #tpu.memory_space<vmem>>, vector<8x256xf32>,
    return
  }
  func.func @transform_0(%arg0: i32) -> (i32, i32) {
    %c0_i32 = arith.constant 0 : i32
    %c0_i32_0 = arith.constant 0 : i32
    return %arg0, %c0_i32 : i32, i32
  }
  func.func @transform_1(%arg0: i32) -> (i32, i32) {
    %c0_i32 = arith.constant 0 : i32
    %c0_i32_0 = arith.constant 0 : i32
    %c0_i32_1 = arith.constant 0 : i32
    return %c0_i32, %c0_i32_0 : i32, i32
  }
  func.func @transform_2(%arg0: i32) -> (i32, i32) {
    %c0_i32 = arith.constant 0 : i32
    %c0_i32_0 = arith.constant 0 : i32
    %c0_i32_1 = arith.constant 0 : i32
    return %c0_i32, %c0_i32_0 : i32, i32
  }
  func.func @transform_3(%arg0: i32) -> (i32, i32) {
    %c0_i32 = arith.constant 0 : i32
    %c0_i32_0 = arith.constant 0 : i32
    %c0_i32_1 = arith.constant 0 : i32
    return %c0_i32, %c0_i32_0 : i32, i32
  }
  func.func @transform_4(%arg0: i32) -> (i32, i32) {
    %c0_i32 = arith.constant 0 : i32
    %c0_i32_0 = arith.constant 0 : i32
    %c0_i32_1 = arith.constant 0 : i32
    return %c0_i32, %c0_i32_0 : i32, i32
  }
  func.func @transform_5(%arg0: i32) -> (i32, i32) {
    %c0_i32 = arith.constant 0 : i32
    %c0_i32_0 = arith.constant 0 : i32
    %c0_i32_1 = arith.constant 0 : i32
    return %c0_i32, %c0_i32_0 : i32, i32
  }
  func.func @transform_6(%arg0: i32) -> (i32, i32) {
    %c0_i32 = arith.constant 0 : i32
    %c0_i32_0 = arith.constant 0 : i32
    %c0_i32_1 = arith.constant 0 : i32
    return %c0_i32, %c0_i32_0 : i32, i32
  }
  func.func @transform_7(%arg0: i32) -> (i32, i32) {
    %c0_i32 = arith.constant 0 : i32
    %c0_i32_0 = arith.constant 0 : i32
    return %arg0, %c0_i32 : i32, i32
  }
}

</mosaic_0001>

<llo_original>
// kernel: tpu_custom_call.1
$region0: #{tpu_custom_call.1}
  #allocation0 [shape = 'u32[]', space=smem, size = 0x4, offset = 0x4, fixed_abs, tag = 'smem constant byte address 0x4 - core index']
  #allocation1 [shape = 'u32[144,128]{1,0:T(1,128)}', space=vmem, size = 0x12000, scoped, tag = 'internal scratch']
  #allocation2 [shape = 'f32[8,384]{1,0:T(8,128)}', space=vmem, size = 0x3000, scoped, tag = 'scratch operand']
  %s0 = inlined_call_operand.hbm [shape: f32[16,262], index: 0, kind: input, shape index: {}]
  %s1 = inlined_call_operand.hbm [shape: f32[384,256], index: 1, kind: input, shape index: {}]
  %s2 = inlined_call_operand.vmem [shape: f32[1,256], index: 2, kind: input, shape index: {}]
  %s3 = inlined_call_operand.hbm [shape: f32[256,256], index: 3, kind: input, shape index: {}]
  %s4 = inlined_call_operand.vmem [shape: f32[1,256], index: 4, kind: input, shape index: {}]
  %s5 = inlined_call_operand.vmem [shape: f32[1,256], index: 5, kind: input, shape index: {}]
  %s6 = inlined_call_operand.vmem [shape: f32[1,256], index: 6, kind: input, shape index: {}]
  %s7 = inlined_call_operand.hbm [shape: f32[16,256], index: 7, kind: output, shape index: {}]
  %s8 = sld [smem:[#allocation0]]
  $region73: #{tpu_custom_call.1} parent=0
    _
  %s10 = ssub.s32 1, %s8
  %s11 = scalar_select 0, %s10, %s8
  $region1: #{tpu_custom_call.1} parent=0
    #allocation3 [shape = 'u8[24576]{0}', space=vmem, size = 0x6000, scoped, tag = 'input window, operand 0']
    #allocation4 [shape = 's32[2]{0}', space=sflag, size = 0x8, scoped, tag = 'scoped memory for tpu_custom_call.1']
    #allocation5 [shape = 's32[2]{0}', space=sflag, size = 0x8, scoped, tag = 'scoped memory for tpu_custom_call.1']
    #allocation6 [shape = 'u8[393216]{0}', space=vmem, size = 0x60000, scoped, tag = 'input window, operand 1, single buffered']
    #allocation7 [shape = 's32[1]{0}', space=sflag, size = 0x4, scoped, tag = 'scoped memory for tpu_custom_call.1']
    #allocation8 [shape = 'u8[262144]{0}', space=vmem, size = 0x40000, scoped, tag = 'input window, operand 3, single buffered']
    #allocation9 [shape = 'u8[16384]{0}', space=vmem, size = 0x4000, scoped, tag = 'output window, operand 0']
    %12 = vsyncpa [#allocation4], 0
    %s13 = scalar_lea.sflag [#allocation4], 1
    %14 = vsyncpa %s13, 0
    %15 = vsyncpa [#allocation7], 0
    %16 = vsyncpa [#allocation5], 0
    %s17 = scalar_lea.sflag [#allocation5], 1
    %18 = vsyncpa %s17, 0
    loop: start=0, step=1, limit=4
    $region2: #{tpu_custom_call.1} parent=1 // loop_pre_header
      _
    $region3: #{tpu_custom_call.1} parent=1 // loop_header
      %s20 = sphi 0, %s24
      %p21 = scmp.ge.s32.totalorder %s20, 4
      %s30 = sphi 0, %s32
      %s33 = sphi 0, %s30
      %s34 = sphi 0, %s33
      %s50 = sphi 0, %s34
      %s54 = sphi 0, %s54
      %s56 = sphi 0, %s54
      %s57 = sphi 0, %s56
      %s71 = sphi 0, %s57
      %s75 = sphi 0, %s75
      %s77 = sphi 0, %s75
      %s78 = sphi 0, %s77
      %s92 = sphi 0, %s78
      %s96 = sphi 0, %s96
      %s98 = sphi 0, %s96
      %s99 = sphi 0, %s98
      %s113 = sphi 0, %s99
      %s117 = sphi 0, %s117
      %s119 = sphi 0, %s117
      %s120 = sphi 0, %s119
      %s134 = sphi 0, %s120
      %s138 = sphi 0, %s138
      %s140 = sphi 0, %s138
      %s141 = sphi 0, %s140
      %s155 = sphi 0, %s141
      %s159 = sphi 0, %s159
      %s161 = sphi 0, %s159
      %s162 = sphi 0, %s161
      %s176 = sphi 0, %s162
      %s182 = sphi 0, %s184
      %s185 = sphi 0, %s182
      %s186 = sphi 0, %s185
      %s202 = sphi 0, %s186
    $region4: #{tpu_custom_call.1} parent=1 // loop_header_branch
      %23 = sbr.rel (%p21) target = $region8
    $region5: #{tpu_custom_call.1} parent=1 // loop_body
      %s25 = ssub.s32 %s20, 1
      %s26 = ssub.s32 %s20, 2
      %s27 = sadd.s32 %s20, 1
      %s28 = ssub.s32 %s20, %s27
      %p29 = scmp.eq.s32.totalorder %s28, 0
      %s31 = sadd.s32 %s30, 1
      %s32 = scalar_select %p29, %s30, %s31
      %p35 = pneg %p29
      %p36 = scmp.eq.s32.totalorder %s20, 1
      %p37 = por %p35, %p36
      %p38 = scmp.ne.s32.totalorder %s30, %s33
      %p39 = scmp.eq.s32.totalorder %s20, 0
      %p40 = por %p38, %p39
      %p41 = scmp.ne.s32.totalorder %s30, %s33
      %p42 = scmp.eq.s32.totalorder %s25, 1
      %p43 = por %p41, %p42
      %p44 = scmp.ne.s32.totalorder %s33, %s34
      %p45 = scmp.eq.s32.totalorder %s25, 0
      %p46 = por %p44, %p45
      %p47 = scmp.ne.s32.totalorder %s33, %s34
      %p48 = scmp.eq.s32.totalorder %s26, 1
      %p49 = por %p47, %p48
      %p51 = scmp.ne.s32.totalorder %s34, %s50
      %p52 = scmp.eq.s32.totalorder %s26, 0
      %p53 = por %p51, %p52
      %s55 = sadd.s32 %s54, 1
      %p58 = scmp.eq.s32.totalorder %s20, 1
      %p59 = scmp.ne.s32.totalorder %s54, %s56
      %p60 = scmp.eq.s32.totalorder %s20, 0
      %p61 = por %p59, %p60
      %p62 = scmp.ne.s32.totalorder %s54, %s56
      %p63 = scmp.eq.s32.totalorder %s25, 1
      %p64 = por %p62, %p63
      %p65 = scmp.ne.s32.totalorder %s56, %s57
      %p66 = scmp.eq.s32.totalorder %s25, 0
      %p67 = por %p65, %p66
      %p68 = scmp.ne.s32.totalorder %s56, %s57
      %p69 = scmp.eq.s32.totalorder %s26, 1
      %p70 = por %p68, %p69
      %p72 = scmp.ne.s32.totalorder %s57, %s71
      %p73 = scmp.eq.s32.totalorder %s26, 0
      %p74 = por %p72, %p73
      %s76 = sadd.s32 %s75, 1
      %p79 = scmp.eq.s32.totalorder %s20, 1
      %p80 = scmp.ne.s32.totalorder %s75, %s77
      %p81 = scmp.eq.s32.totalorder %s20, 0
      %p82 = por %p80, %p81
      %p83 = scmp.ne.s32.totalorder %s75, %s77
      %p84 = scmp.eq.s32.totalorder %s25, 1
      %p85 = por %p83, %p84
      %p86 = scmp.ne.s32.totalorder %s77, %s78
      %p87 = scmp.eq.s32.totalorder %s25, 0
      %p88 = por %p86, %p87
      %p89 = scmp.ne.s32.totalorder %s77, %s78
      %p90 = scmp.eq.s32.totalorder %s26, 1
      %p91 = por %p89, %p90
      %p93 = scmp.ne.s32.totalorder %s78, %s92
      %p94 = scmp.eq.s32.totalorder %s26, 0
      %p95 = por %p93, %p94
      %s97 = sadd.s32 %s96, 1
      %p100 = scmp.eq.s32.totalorder %s20, 1
      %p101 = scmp.ne.s32.totalorder %s96, %s98
      %p102 = scmp.eq.s32.totalorder %s20, 0
      %p103 = por %p101, %p102
      %p104 = scmp.ne.s32.totalorder %s96, %s98
      %p105 = scmp.eq.s32.totalorder %s25, 1
      %p106 = por %p104, %p105
      %p107 = scmp.ne.s32.totalorder %s98, %s99
      %p108 = scmp.eq.s32.totalorder %s25, 0
      %p109 = por %p107, %p108
      %p110 = scmp.ne.s32.totalorder %s98, %s99
      %p111 = scmp.eq.s32.totalorder %s26, 1
      %p112 = por %p110, %p111
      %p114 = scmp.ne.s32.totalorder %s99, %s113
      %p115 = scmp.eq.s32.totalorder %s26, 0
      %p116 = por %p114, %p115
      %s118 = sadd.s32 %s117, 1
      %p121 = scmp.eq.s32.totalorder %s20, 1
      %p122 = scmp.ne.s32.totalorder %s117, %s119
      %p123 = scmp.eq.s32.totalorder %s20, 0
      %p124 = por %p122, %p123
      %p125 = scmp.ne.s32.totalorder %s117, %s119
      %p126 = scmp.eq.s32.totalorder %s25, 1
      %p127 = por %p125, %p126
      %p128 = scmp.ne.s32.totalorder %s119, %s120
      %p129 = scmp.eq.s32.totalorder %s25, 0
      %p130 = por %p128, %p129
      %p131 = scmp.ne.s32.totalorder %s119, %s120
      %p132 = scmp.eq.s32.totalorder %s26, 1
      %p133 = por %p131, %p132
      %p135 = scmp.ne.s32.totalorder %s120, %s134
      %p136 = scmp.eq.s32.totalorder %s26, 0
      %p137 = por %p135, %p136
      %s139 = sadd.s32 %s138, 1
      %p142 = scmp.eq.s32.totalorder %s20, 1
      %p143 = scmp.ne.s32.totalorder %s138, %s140
      %p144 = scmp.eq.s32.totalorder %s20, 0
      %p145 = por %p143, %p144
      %p146 = scmp.ne.s32.totalorder %s138, %s140
      %p147 = scmp.eq.s32.totalorder %s25, 1
      %p148 = por %p146, %p147
      %p149 = scmp.ne.s32.totalorder %s140, %s141
      %p150 = scmp.eq.s32.totalorder %s25, 0
      %p151 = por %p149, %p150
      %p152 = scmp.ne.s32.totalorder %s140, %s141
      %p153 = scmp.eq.s32.totalorder %s26, 1
      %p154 = por %p152, %p153
      %p156 = scmp.ne.s32.totalorder %s141, %s155
      %p157 = scmp.eq.s32.totalorder %s26, 0
      %p158 = por %p156, %p157
      %s160 = sadd.s32 %s159, 1
      %p163 = scmp.eq.s32.totalorder %s20, 1
      %p164 = scmp.ne.s32.totalorder %s159, %s161
      %p165 = scmp.eq.s32.totalorder %s20, 0
      %p166 = por %p164, %p165
      %p167 = scmp.ne.s32.totalorder %s159, %s161
      %p168 = scmp.eq.s32.totalorder %s25, 1
      %p169 = por %p167, %p168
      %p170 = scmp.ne.s32.totalorder %s161, %s162
      %p171 = scmp.eq.s32.totalorder %s25, 0
      %p172 = por %p170, %p171
      %p173 = scmp.ne.s32.totalorder %s161, %s162
      %p174 = scmp.eq.s32.totalorder %s26, 1
      %p175 = por %p173, %p174
      %p177 = scmp.ne.s32.totalorder %s162, %s176
      %p178 = scmp.eq.s32.totalorder %s26, 0
      %p179 = por %p177, %p178
      %s180 = ssub.s32 %s20, %s27
      %p181 = scmp.eq.s32.totalorder %s180, 0
      %s183 = sadd.s32 %s182, 1
      %s184 = scalar_select %p181, %s182, %s183
      %p187 = pneg %p181
      %p188 = scmp.eq.s32.totalorder %s20, 1
      %p189 = por %p187, %p188
      %p190 = scmp.ne.s32.totalorder %s182, %s185
      %p191 = scmp.eq.s32.totalorder %s20, 0
      %p192 = por %p190, %p191
      %p193 = scmp.ne.s32.totalorder %s182, %s185
      %p194 = scmp.eq.s32.totalorder %s25, 1
      %p195 = por %p193, %p194
      %p196 = scmp.ne.s32.totalorder %s185, %s186
      %p197 = scmp.eq.s32.totalorder %s25, 0
      %p198 = por %p196, %p197
      %p199 = scmp.ne.s32.totalorder %s185, %s186
      %p200 = scmp.eq.s32.totalorder %s26, 1
      %p201 = por %p199, %p200
      %p203 = scmp.ne.s32.totalorder %s186, %s202
      %p204 = scmp.eq.s32.totalorder %s26, 0
      %p205 = por %p203, %p204
      %p206 = scmp.le.s32.totalorder 1, %s20
      %p207 = scmp.lt.s32.totalorder %s20, 3
      %p208 = pnand %p206, %p207
      %p209 = pneg %p208
      // Predicated region
      $region9: #{tpu_custom_call.1} parent=5 // pred_check
        _
      $region10: #{tpu_custom_call.1} parent=5 // pred_check_branch
        %211 = sbr.rel (%p208) target = $region12
      $region11: #{tpu_custom_call.1} parent=5 // pred_region
        %s212 = ssub.s32 %s20, 1
        // Predicated region
        $region13: #{tpu_custom_call.1} parent=11 // pred_check
          %p213 = pneg %p67
        $region14: #{tpu_custom_call.1} parent=11 // pred_check_branch
          %215 = sbr.rel (%p213) target = $region16
        $region15: #{tpu_custom_call.1} parent=11 // pred_region
          %s217 = ssub.s32 12288, 12288
          %218 = vsyncadd [#allocation7], %s217
          %s219 = sshll.u32 [#allocation6], 4
          %s220 = int_to_ptr.vmem [resolvable:$true] %s219
          %225 = dma.hbm_to_vmem [thread:$0]  %s1, 12288, %s220, [#allocation7], 256, 256, 16
        $region16: #{tpu_custom_call.1} parent=11 // pred_fallthru
          _
        // Predicated region
        $region17: #{tpu_custom_call.1} parent=11 // pred_check
          %p226 = pneg %p88
        $region18: #{tpu_custom_call.1} parent=11 // pred_check_branch
          %228 = sbr.rel (%p226) target = $region20
        $region19: #{tpu_custom_call.1} parent=11 // pred_region
          _
        $region20: #{tpu_custom_call.1} parent=11 // pred_fallthru
          _
        // Predicated region
        $region21: #{tpu_custom_call.1} parent=11 // pred_check
          %p229 = pneg %p109
        $region22: #{tpu_custom_call.1} parent=11 // pred_check_branch
          %231 = sbr.rel (%p229) target = $region24
        $region23: #{tpu_custom_call.1} parent=11 // pred_region
          %s233 = ssub.s32 8192, 8192
          %234 = vsyncadd [#allocation7], %s233
          %s235 = sshll.u32 [#allocation8], 4
          %s236 = int_to_ptr.vmem [resolvable:$true] %s235
          %241 = dma.hbm_to_vmem [thread:$0]  %s3, 8192, %s236, [#allocation7], 256, 256, 16
        $region24: #{tpu_custom_call.1} parent=11 // pred_fallthru
          _
        // Predicated region
        $region25: #{tpu_custom_call.1} parent=11 // pred_check
          %p242 = pneg %p130
        $region26: #{tpu_custom_call.1} parent=11 // pred_check_branch
          %244 = sbr.rel (%p242) target = $region28
        $region27: #{tpu_custom_call.1} parent=11 // pred_region
          _
        $region28: #{tpu_custom_call.1} parent=11 // pred_fallthru
          _
        // Predicated region
        $region29: #{tpu_custom_call.1} parent=11 // pred_check
          %p245 = pneg %p151
        $region30: #{tpu_custom_call.1} parent=11 // pred_check_branch
          %247 = sbr.rel (%p245) target = $region32
        $region31: #{tpu_custom_call.1} parent=11 // pred_region
          _
        $region32: #{tpu_custom_call.1} parent=11 // pred_fallthru
          _
        // Predicated region
        $region33: #{tpu_custom_call.1} parent=11 // pred_check
          %p248 = pneg %p172
        $region34: #{tpu_custom_call.1} parent=11 // pred_check_branch
          %250 = sbr.rel (%p248) target = $region36
        $region35: #{tpu_custom_call.1} parent=11 // pred_region
          _
        $region36: #{tpu_custom_call.1} parent=11 // pred_fallthru
          _
      $region12: #{tpu_custom_call.1} parent=5 // pred_fallthru
        _
      %p251 = scmp.lt.s32.totalorder %s20, 2
      // Predicated region
      $region37: #{tpu_custom_call.1} parent=5 // pred_check
        %p252 = pneg %p251
      $region38: #{tpu_custom_call.1} parent=5 // pred_check_branch
        %254 = sbr.rel (%p252) target = $region40
      $region39: #{tpu_custom_call.1} parent=5 // pred_region
        // Predicated region
        $region41: #{tpu_custom_call.1} parent=39 // pred_check
          %p255 = pneg %p40
        $region42: #{tpu_custom_call.1} parent=39 // pred_check_branch
          %257 = sbr.rel (%p255) target = $region44
        $region43: #{tpu_custom_call.1} parent=39 // pred_region
          %s258 = sand.u32 %s30, 1
          %s259 = scalar_lea.sflag [#allocation4], %s258
          %s260 = sand.u32 %s30, 1
          %s261 = smul.addr %s260, 24
          %s262 = scalar_lea.vmem [#allocation3], %s261
          %s264 = ssub.s32 384, 384
          %265 = vsyncadd %s259, %s264
          %s266 = smul.addr %s20, 3
          %s267 = smul.addr %s266, 128
          %s268 = scalar_lea.hbm %s0, %s267
          %s270 = sshll.u32 %s262, 4
          %s271 = int_to_ptr.vmem [resolvable:$true] %s270
          %273 = dma.hbm_to_vmem [thread:$0]  %s268, 384, %s271, %s259
        $region44: #{tpu_custom_call.1} parent=39 // pred_fallthru
          _
      $region40: #{tpu_custom_call.1} parent=5 // pred_fallthru
        _
      %p274 = scmp.le.s32.totalorder 1, %s20
      %p275 = scmp.lt.s32.totalorder %s20, 3
      %p276 = pnand %p274, %p275
      %p277 = pneg %p276
      // Predicated region
      $region45: #{tpu_custom_call.1} parent=5 // pred_check
        _
      $region46: #{tpu_custom_call.1} parent=5 // pred_check_branch
        %279 = sbr.rel (%p276) target = $region48
      $region47: #{tpu_custom_call.1} parent=5 // pred_region
        %s280 = ssub.s32 %s20, 1
        %s281 = sand.u32 %s33, 1
        %s282 = scalar_lea.sflag [#allocation4], %s281
        %s283 = sand.u32 %s33, 1
        %s284 = smul.addr %s283, 24
        %s285 = scalar_lea.vmem [#allocation3], %s284
        // Predicated region
        $region49: #{tpu_custom_call.1} parent=47 // pred_check
          %p286 = pneg %p46
        $region50: #{tpu_custom_call.1} parent=47 // pred_check_branch
          %288 = sbr.rel (%p286) target = $region52
        $region51: #{tpu_custom_call.1} parent=47 // pred_region
          %289 = dma.done %s282, 384
        $region52: #{tpu_custom_call.1} parent=47 // pred_fallthru
          _
        // Predicated region
        $region53: #{tpu_custom_call.1} parent=47 // pred_check
          %p290 = pneg %p67
        $region54: #{tpu_custom_call.1} parent=47 // pred_check_branch
          %292 = sbr.rel (%p290) target = $region56
        $region55: #{tpu_custom_call.1} parent=47 // pred_region
          %293 = dma.done [#allocation7], 12288
        $region56: #{tpu_custom_call.1} parent=47 // pred_fallthru
          _
        // Predicated region
        $region57: #{tpu_custom_call.1} parent=47 // pred_check
          %p294 = pneg %p109
        $region58: #{tpu_custom_call.1} parent=47 // pred_check_branch
          %296 = sbr.rel (%p294) target = $region60
        $region59: #{tpu_custom_call.1} parent=47 // pred_region
          %297 = dma.done [#allocation7], 8192
        $region60: #{tpu_custom_call.1} parent=47 // pred_fallthru
          _
        %s298 = sand.u32 %s33, 1
        %s299 = scalar_lea.sflag [#allocation4], %s298
        %s300 = sand.u32 %s33, 1
        %s301 = smul.addr %s300, 24
        %s302 = scalar_lea.vmem [#allocation3], %s301
        %p303 = pneg %p46
        %p304 = pneg %p43
        %p305 = pneg %p67
        %p306 = pneg %p64
        %p307 = pneg %p88
        %p308 = pneg %p85
        %p309 = pneg %p109
        %p310 = pneg %p106
        %p311 = pneg %p130
        %p312 = pneg %p127
        %p313 = pneg %p151
        %p314 = pneg %p148
        %p315 = pneg %p172
        %p316 = pneg %p169
        %p317 = pneg %p198
        %p318 = pneg %p195
        %s319 = sand.u32 %s185, 1
        %s320 = scalar_lea.sflag [#allocation5], %s319
        %s321 = sand.u32 %s185, 1
        %s322 = smul.addr %s321, 16
        %s323 = scalar_lea.vmem [#allocation9], %s322
        %324 = vst [vmem:[#allocation2 + $0x10] sm:$0xff] 0.0
        %v325 = vld [vmem:[%s285] sm:$0xff]
        %v326 = vld [vmem:[%s285 + $0x8] sm:$0xff]
        %v327 = vld [vmem:[%s285 + $0x10] sm:$0xff]
        %328 = vst [vmem:[#allocation2] sm:$0xff] %v325
        %329 = vst [vmem:[#allocation2 + $0x8] sm:$0xff] %v326
        %vm330 = vcmask 48128
        %331 = vst.msk [vmem:[#allocation2 + $0x10] sm:$0xff] %vm330, %v327
        %v332 = vld [vmem:[#allocation2] sm:$0xff]
        %v333 = vld [vmem:[#allocation2 + $0x8] sm:$0xff]
        %v334 = vld [vmem:[#allocation2 + $0x10] sm:$0xff]
        %v335 = vld [vmem:[#allocation6] sm:$0xff]
        %v336 = vld [vmem:[#allocation6 + $0x8] sm:$0xff]
        %v337 = vld [vmem:[#allocation6 + $0x10] sm:$0xff]
        %v338 = vld [vmem:[#allocation6 + $0x18] sm:$0xff]
        %v339 = vld [vmem:[#allocation6 + $0x20] sm:$0xff]
        %v340 = vld [vmem:[#allocation6 + $0x28] sm:$0xff]
        %v341 = vld [vmem:[#allocation6 + $0x30] sm:$0xff]
        %v342 = vld [vmem:[#allocation6 + $0x38] sm:$0xff]
        %v343 = vld [vmem:[#allocation6 + $0x40] sm:$0xff]
        %v344 = vld [vmem:[#allocation6 + $0x48] sm:$0xff]
        %v345 = vld [vmem:[#allocation6 + $0x50] sm:$0xff]
        %v346 = vld [vmem:[#allocation6 + $0x58] sm:$0xff]
        %v347 = vld [vmem:[#allocation6 + $0x60] sm:$0xff]
        %v348 = vld [vmem:[#allocation6 + $0x68] sm:$0xff]
        %v349 = vld [vmem:[#allocation6 + $0x70] sm:$0xff]
        %v350 = vld [vmem:[#allocation6 + $0x78] sm:$0xff]
        %v351 = vld [vmem:[#allocation6 + $0x80] sm:$0xff]
        %v352 = vld [vmem:[#allocation6 + $0x88] sm:$0xff]
        %v353 = vld [vmem:[#allocation6 + $0x90] sm:$0xff]
        %v354 = vld [vmem:[#allocation6 + $0x98] sm:$0xff]
        %v355 = vld [vmem:[#allocation6 + $0xa0] sm:$0xff]
        %v356 = vld [vmem:[#allocation6 + $0xa8] sm:$0xff]
        %v357 = vld [vmem:[#allocation6 + $0xb0] sm:$0xff]
        %v358 = vld [vmem:[#allocation6 + $0xb8] sm:$0xff]
        %v359 = vld [vmem:[#allocation6 + $0xc0] sm:$0xff]
        %v360 = vld [vmem:[#allocation6 + $0xc8] sm:$0xff]
        %v361 = vld [vmem:[#allocation6 + $0xd0] sm:$0xff]
        %v362 = vld [vmem:[#allocation6 + $0xd8] sm:$0xff]
        %v363 = vld [vmem:[#allocation6 + $0xe0] sm:$0xff]
        %v364 = vld [vmem:[#allocation6 + $0xe8] sm:$0xff]
        %v365 = vld [vmem:[#allocation6 + $0xf0] sm:$0xff]
        %v366 = vld [vmem:[#allocation6 + $0xf8] sm:$0xff]
        %v367 = vld [vmem:[#allocation6 + $0x100] sm:$0xff]
        %v368 = vld [vmem:[#allocation6 + $0x108] sm:$0xff]
        %v369 = vld [vmem:[#allocation6 + $0x110] sm:$0xff]
        %v370 = vld [vmem:[#allocation6 + $0x118] sm:$0xff]
        %v371 = vld [vmem:[#allocation6 + $0x120] sm:$0xff]
        %v372 = vld [vmem:[#allocation6 + $0x128] sm:$0xff]
        %v373 = vld [vmem:[#allocation6 + $0x130] sm:$0xff]
        %v374 = vld [vmem:[#allocation6 + $0x138] sm:$0xff]
        %v375 = vld [vmem:[#allocation6 + $0x140] sm:$0xff]
        %v376 = vld [vmem:[#allocation6 + $0x148] sm:$0xff]
        %v377 = vld [vmem:[#allocation6 + $0x150] sm:$0xff]
        %v378 = vld [vmem:[#allocation6 + $0x158] sm:$0xff]
        %v379 = vld [vmem:[#allocation6 + $0x160] sm:$0xff]
        %v380 = vld [vmem:[#allocation6 + $0x168] sm:$0xff]
        %v381 = vld [vmem:[#allocation6 + $0x170] sm:$0xff]
        %v382 = vld [vmem:[#allocation6 + $0x178] sm:$0xff]
        %v383 = vld [vmem:[#allocation6 + $0x180] sm:$0xff]
        %v384 = vld [vmem:[#allocation6 + $0x188] sm:$0xff]
        %v385 = vld [vmem:[#allocation6 + $0x190] sm:$0xff]
        %v386 = vld [vmem:[#allocation6 + $0x198] sm:$0xff]
        %v387 = vld [vmem:[#allocation6 + $0x1a0] sm:$0xff]
        %v388 = vld [vmem:[#allocation6 + $0x1a8] sm:$0xff]
        %v389 = vld [vmem:[#allocation6 + $0x1b0] sm:$0xff]
        %v390 = vld [vmem:[#allocation6 + $0x1b8] sm:$0xff]
        %v391 = vld [vmem:[#allocation6 + $0x1c0] sm:$0xff]
        %v392 = vld [vmem:[#allocation6 + $0x1c8] sm:$0xff]
        %v393 = vld [vmem:[#allocation6 + $0x1d0] sm:$0xff]
        %v394 = vld [vmem:[#allocation6 + $0x1d8] sm:$0xff]
        %v395 = vld [vmem:[#allocation6 + $0x1e0] sm:$0xff]
        %v396 = vld [vmem:[#allocation6 + $0x1e8] sm:$0xff]
        %v397 = vld [vmem:[#allocation6 + $0x1f0] sm:$0xff]
        %v398 = vld [vmem:[#allocation6 + $0x1f8] sm:$0xff]
        %v399 = vld [vmem:[#allocation6 + $0x200] sm:$0xff]
        %v400 = vld [vmem:[#allocation6 + $0x208] sm:$0xff]
        %v401 = vld [vmem:[#allocation6 + $0x210] sm:$0xff]
        %v402 = vld [vmem:[#allocation6 + $0x218] sm:$0xff]
        %v403 = vld [vmem:[#allocation6 + $0x220] sm:$0xff]
        %v404 = vld [vmem:[#allocation6 + $0x228] sm:$0xff]
        %v405 = vld [vmem:[#allocation6 + $0x230] sm:$0xff]
        %v406 = vld [vmem:[#allocation6 + $0x238] sm:$0xff]
        %v407 = vld [vmem:[#allocation6 + $0x240] sm:$0xff]
        %v408 = vld [vmem:[#allocation6 + $0x248] sm:$0xff]
        %v409 = vld [vmem:[#allocation6 + $0x250] sm:$0xff]
        %v410 = vld [vmem:[#allocation6 + $0x258] sm:$0xff]
        %v411 = vld [vmem:[#allocation6 + $0x260] sm:$0xff]
        %v412 = vld [vmem:[#allocation6 + $0x268] sm:$0xff]
        %v413 = vld [vmem:[#allocation6 + $0x270] sm:$0xff]
        %v414 = vld [vmem:[#allocation6 + $0x278] sm:$0xff]
        %v415 = vld [vmem:[#allocation6 + $0x280] sm:$0xff]
        %v416 = vld [vmem:[#allocation6 + $0x288] sm:$0xff]
        %v417 = vld [vmem:[#allocation6 + $0x290] sm:$0xff]
        %v418 = vld [vmem:[#allocation6 + $0x298] sm:$0xff]
        %v419 = vld [vmem:[#allocation6 + $0x2a0] sm:$0xff]
        %v420 = vld [vmem:[#allocation6 + $0x2a8] sm:$0xff]
        %v421 = vld [vmem:[#allocation6 + $0x2b0] sm:$0xff]
        %v422 = vld [vmem:[#allocation6 + $0x2b8] sm:$0xff]
        %v423 = vld [vmem:[#allocation6 + $0x2c0] sm:$0xff]
        %v424 = vld [vmem:[#allocation6 + $0x2c8] sm:$0xff]
        %v425 = vld [vmem:[#allocation6 + $0x2d0] sm:$0xff]
        %v426 = vld [vmem:[#allocation6 + $0x2d8] sm:$0xff]
        %v427 = vld [vmem:[#allocation6 + $0x2e0] sm:$0xff]
        %v428 = vld [vmem:[#allocation6 + $0x2e8] sm:$0xff]
        %v429 = vld [vmem:[#allocation6 + $0x2f0] sm:$0xff]
        %v430 = vld [vmem:[#allocation6 + $0x2f8] sm:$0xff]
        %v431 = vld [vmem:[%s2] sm:$0x3]
        %v433 = vlaneseq
        %v434 = vshrl.u32 %v433, 7
        %v435 = vsub.s32 0, %v434
        %v436 = vrot.slane %v431, %v435
        %v437 = vlaneseq
        %v438 = vshrl.u32 %v437, 7
        %v439 = vsub.s32 1, %v438
        %v440 = vrot.slane %v431, %v439
        %443 = vmatprep.subr.mxu0 %v336
        %444 = vmatpush1.msra.mxu0 %v335
        %445 = vmatprep.subr.mxu0 %v338
        %446 = vmatpush1.msra.mxu0 %v337
        %447 = vmatprep.subr.mxu0 %v340
        %448 = vmatpush1.msra.mxu0 %v339
        %449 = vmatprep.subr.mxu0 %v342
        %450 = vmatpush1.msra.mxu0 %v341
        %451 = vmatprep.subr.mxu0 %v344
        %452 = vmatpush1.msra.mxu0 %v343
        %453 = vmatprep.subr.mxu0 %v346
        %454 = vmatpush1.msra.mxu0 %v345
        %455 = vmatprep.subr.mxu0 %v348
        %456 = vmatpush1.msra.mxu0 %v347
        %457 = vmatprep.subr.mxu0 %v350
        %458 = vmatpush1.msra.mxu0 %v349
        %459 = vmatprep.subr.mxu0 %v352
        %460 = vmatpush1.msra.mxu0 %v351
        %461 = vmatprep.subr.mxu0 %v354
        %462 = vmatpush1.msra.mxu0 %v353
        %463 = vmatprep.subr.mxu0 %v356
        %464 = vmatpush1.msra.mxu0 %v355
        %465 = vmatprep.subr.mxu0 %v358
        %466 = vmatpush1.msra.mxu0 %v357
        %467 = vmatprep.subr.mxu0 %v360
        %468 = vmatpush1.msra.mxu0 %v359
        %469 = vmatprep.subr.mxu0 %v362
        %470 = vmatpush1.msra.mxu0 %v361
        %471 = vmatprep.subr.mxu0 %v364
        %472 = vmatpush1.msra.mxu0 %v363
        %473 = vmatprep.subr.mxu0 %v366
        %474 = vmatpush1.msra.mxu0 %v365
        %475 = vmatprep.subr.mxu0 %v368
        %476 = vmatpush1.msra.mxu0 %v367
        %477 = vmatprep.subr.mxu0 %v370
        %478 = vmatpush1.msra.mxu0 %v369
        %479 = vmatprep.subr.mxu0 %v372
        %480 = vmatpush1.msra.mxu0 %v371
        %481 = vmatprep.subr.mxu0 %v374
        %482 = vmatpush1.msra.mxu0 %v373
        %483 = vmatprep.subr.mxu0 %v376
        %484 = vmatpush1.msra.mxu0 %v375
        %485 = vmatprep.subr.mxu0 %v378
        %486 = vmatpush1.msra.mxu0 %v377
        %487 = vmatprep.subr.mxu0 %v380
        %488 = vmatpush1.msra.mxu0 %v379
        %489 = vmatprep.subr.mxu0 %v382
        %490 = vmatpush1.msra.mxu0 %v381
        %491 = vmatprep.subr.mxu0 %v384
        %492 = vmatpush1.msra.mxu0 %v383
        %493 = vmatprep.subr.mxu0 %v386
        %494 = vmatpush1.msra.mxu0 %v385
        %495 = vmatprep.subr.mxu0 %v388
        %496 = vmatpush1.msra.mxu0 %v387
        %497 = vmatprep.subr.mxu0 %v390
        %498 = vmatpush1.msra.mxu0 %v389
        %499 = vmatprep.subr.mxu0 %v392
        %500 = vmatpush1.msra.mxu0 %v391
        %501 = vmatprep.subr.mxu0 %v394
        %502 = vmatpush1.msra.mxu0 %v393
        %503 = vmatprep.subr.mxu0 %v396
        %504 = vmatpush1.msra.mxu0 %v395
        %505 = vmatprep.subr.mxu0 %v398
        %506 = vmatpush1.msra.mxu0 %v397
        %507 = vmatprep.mubr.f32.mxu0 %v333
        %508 = vmatmul.mubr.f32.gmra.mrb[0].mxu0 %v332
        %v509 = vpop.f32.mrb[0].mxu0
        %v510 = vadd.f32 %v436, %v509
        %v511 = vpop.f32.mrb[0].mxu0
        %v512 = vadd.f32 %v440, %v511
        %513 = vdwg.mxu0
        %514 = vmatprep.subr.mxu0 %v400
        %515 = vmatpush1.msra.mxu0 %v399
        %516 = vmatprep.subr.mxu0 %v402
        %517 = vmatpush1.msra.mxu0 %v401
        %518 = vmatprep.subr.mxu0 %v404
        %519 = vmatpush1.msra.mxu0 %v403
        %520 = vmatprep.subr.mxu0 %v406
        %521 = vmatpush1.msra.mxu0 %v405
        %522 = vmatprep.subr.mxu0 %v408
        %523 = vmatpush1.msra.mxu0 %v407
        %524 = vmatprep.subr.mxu0 %v410
        %525 = vmatpush1.msra.mxu0 %v409
        %526 = vmatprep.subr.mxu0 %v412
        %527 = vmatpush1.msra.mxu0 %v411
        %528 = vmatprep.subr.mxu0 %v414
        %529 = vmatpush1.msra.mxu0 %v413
        %530 = vmatprep.subr.mxu0 %v416
        %531 = vmatpush1.msra.mxu0 %v415
        %532 = vmatprep.subr.mxu0 %v418
        %533 = vmatpush1.msra.mxu0 %v417
        %534 = vmatprep.subr.mxu0 %v420
        %535 = vmatpush1.msra.mxu0 %v419
        %536 = vmatprep.subr.mxu0 %v422
        %537 = vmatpush1.msra.mxu0 %v421
        %538 = vmatprep.subr.mxu0 %v424
        %539 = vmatpush1.msra.mxu0 %v423
        %540 = vmatprep.subr.mxu0 %v426
        %541 = vmatpush1.msra.mxu0 %v425
        %542 = vmatprep.subr.mxu0 %v428
        %543 = vmatpush1.msra.mxu0 %v427
        %544 = vmatprep.subr.mxu0 %v430
        %545 = vmatpush1.msra.mxu0 %v429
        %546 = vmatprep.subr.mxu0 0.0
        %547 = vmatpush1.msra.mxu0 0.0
        %548 = vmatprep.subr.mxu0 0.0
        %549 = vmatpush1.msra.mxu0 0.0
        %550 = vmatprep.subr.mxu0 0.0
        %551 = vmatpush1.msra.mxu0 0.0
        %552 = vmatprep.subr.mxu0 0.0
        %553 = vmatpush1.msra.mxu0 0.0
        %554 = vmatprep.subr.mxu0 0.0
        %555 = vmatpush1.msra.mxu0 0.0
        %556 = vmatprep.subr.mxu0 0.0
        %557 = vmatpush1.msra.mxu0 0.0
        %558 = vmatprep.subr.mxu0 0.0
        %559 = vmatpush1.msra.mxu0 0.0
        %560 = vmatprep.subr.mxu0 0.0
        %561 = vmatpush1.msra.mxu0 0.0
        %562 = vmatprep.subr.mxu0 0.0
        %563 = vmatpush1.msra.mxu0 0.0
        %564 = vmatprep.subr.mxu0 0.0
        %565 = vmatpush1.msra.mxu0 0.0
        %566 = vmatprep.subr.mxu0 0.0
        %567 = vmatpush1.msra.mxu0 0.0
        %568 = vmatprep.subr.mxu0 0.0
        %569 = vmatpush1.msra.mxu0 0.0
        %570 = vmatprep.subr.mxu0 0.0
        %571 = vmatpush1.msra.mxu0 0.0
        %572 = vmatprep.subr.mxu0 0.0
        %573 = vmatpush1.msra.mxu0 0.0
        %574 = vmatprep.subr.mxu0 0.0
        %575 = vmatpush1.msra.mxu0 0.0
        %576 = vmatprep.subr.mxu0 0.0
        %577 = vmatpush1.msra.mxu0 0.0
        %578 = vmatprep.mubr.f32.mxu0 0.0
        %579 = vmatmul.mubr.f32.gmra.mrb[0].mxu0 %v334
        %v580 = vpop.f32.mrb[0].mxu0
        %v581 = vadd.f32 %v510, %v580
        %v582 = vpop.f32.mrb[0].mxu0
        %v583 = vadd.f32 %v512, %v582
        %584 = vdwg.mxu0
        %v585 = vmax.f32 %v581, 0.0
        %v586 = vmax.f32 %v583, 0.0
        %v587 = vld [vmem:[#allocation8] sm:$0xff]
        %v588 = vld [vmem:[#allocation8 + $0x8] sm:$0xff]
        %v589 = vld [vmem:[#allocation8 + $0x10] sm:$0xff]
        %v590 = vld [vmem:[#allocation8 + $0x18] sm:$0xff]
        %v591 = vld [vmem:[#allocation8 + $0x20] sm:$0xff]
        %v592 = vld [vmem:[#allocation8 + $0x28] sm:$0xff]
        %v593 = vld [vmem:[#allocation8 + $0x30] sm:$0xff]
        %v594 = vld [vmem:[#allocation8 + $0x38] sm:$0xff]
        %v595 = vld [vmem:[#allocation8 + $0x40] sm:$0xff]
        %v596 = vld [vmem:[#allocation8 + $0x48] sm:$0xff]
        %v597 = vld [vmem:[#allocation8 + $0x50] sm:$0xff]
        %v598 = vld [vmem:[#allocation8 + $0x58] sm:$0xff]
        %v599 = vld [vmem:[#allocation8 + $0x60] sm:$0xff]
        %v600 = vld [vmem:[#allocation8 + $0x68] sm:$0xff]
        %v601 = vld [vmem:[#allocation8 + $0x70] sm:$0xff]
        %v602 = vld [vmem:[#allocation8 + $0x78] sm:$0xff]
        %v603 = vld [vmem:[#allocation8 + $0x80] sm:$0xff]
        %v604 = vld [vmem:[#allocation8 + $0x88] sm:$0xff]
        %v605 = vld [vmem:[#allocation8 + $0x90] sm:$0xff]
        %v606 = vld [vmem:[#allocation8 + $0x98] sm:$0xff]
        %v607 = vld [vmem:[#allocation8 + $0xa0] sm:$0xff]
        %v608 = vld [vmem:[#allocation8 + $0xa8] sm:$0xff]
        %v609 = vld [vmem:[#allocation8 + $0xb0] sm:$0xff]
        %v610 = vld [vmem:[#allocation8 + $0xb8] sm:$0xff]
        %v611 = vld [vmem:[#allocation8 + $0xc0] sm:$0xff]
        %v612 = vld [vmem:[#allocation8 + $0xc8] sm:$0xff]
        %v613 = vld [vmem:[#allocation8 + $0xd0] sm:$0xff]
        %v614 = vld [vmem:[#allocation8 + $0xd8] sm:$0xff]
        %v615 = vld [vmem:[#allocation8 + $0xe0] sm:$0xff]
        %v616 = vld [vmem:[#allocation8 + $0xe8] sm:$0xff]
        %v617 = vld [vmem:[#allocation8 + $0xf0] sm:$0xff]
        %v618 = vld [vmem:[#allocation8 + $0xf8] sm:$0xff]
        %v619 = vld [vmem:[#allocation8 + $0x100] sm:$0xff]
        %v620 = vld [vmem:[#allocation8 + $0x108] sm:$0xff]
        %v621 = vld [vmem:[#allocation8 + $0x110] sm:$0xff]
        %v622 = vld [vmem:[#allocation8 + $0x118] sm:$0xff]
        %v623 = vld [vmem:[#allocation8 + $0x120] sm:$0xff]
        %v624 = vld [vmem:[#allocation8 + $0x128] sm:$0xff]
        %v625 = vld [vmem:[#allocation8 + $0x130] sm:$0xff]
        %v626 = vld [vmem:[#allocation8 + $0x138] sm:$0xff]
        %v627 = vld [vmem:[#allocation8 + $0x140] sm:$0xff]
        %v628 = vld [vmem:[#allocation8 + $0x148] sm:$0xff]
        %v629 = vld [vmem:[#allocation8 + $0x150] sm:$0xff]
        %v630 = vld [vmem:[#allocation8 + $0x158] sm:$0xff]
        %v631 = vld [vmem:[#allocation8 + $0x160] sm:$0xff]
        %v632 = vld [vmem:[#allocation8 + $0x168] sm:$0xff]
        %v633 = vld [vmem:[#allocation8 + $0x170] sm:$0xff]
        %v634 = vld [vmem:[#allocation8 + $0x178] sm:$0xff]
        %v635 = vld [vmem:[#allocation8 + $0x180] sm:$0xff]
        %v636 = vld [vmem:[#allocation8 + $0x188] sm:$0xff]
        %v637 = vld [vmem:[#allocation8 + $0x190] sm:$0xff]
        %v638 = vld [vmem:[#allocation8 + $0x198] sm:$0xff]
        %v639 = vld [vmem:[#allocation8 + $0x1a0] sm:$0xff]
        %v640 = vld [vmem:[#allocation8 + $0x1a8] sm:$0xff]
        %v641 = vld [vmem:[#allocation8 + $0x1b0] sm:$0xff]
        %v642 = vld [vmem:[#allocation8 + $0x1b8] sm:$0xff]
        %v643 = vld [vmem:[#allocation8 + $0x1c0] sm:$0xff]
        %v644 = vld [vmem:[#allocation8 + $0x1c8] sm:$0xff]
        %v645 = vld [vmem:[#allocation8 + $0x1d0] sm:$0xff]
        %v646 = vld [vmem:[#allocation8 + $0x1d8] sm:$0xff]
        %v647 = vld [vmem:[#allocation8 + $0x1e0] sm:$0xff]
        %v648 = vld [vmem:[#allocation8 + $0x1e8] sm:$0xff]
        %v649 = vld [vmem:[#allocation8 + $0x1f0] sm:$0xff]
        %v650 = vld [vmem:[#allocation8 + $0x1f8] sm:$0xff]
        %v651 = vld [vmem:[%s4] sm:$0x3]
        %v653 = vlaneseq
        %v654 = vshrl.u32 %v653, 7
        %v655 = vsub.s32 0, %v654
        %v656 = vrot.slane %v651, %v655
        %v657 = vlaneseq
        %v658 = vshrl.u32 %v657, 7
        %v659 = vsub.s32 1, %v658
        %v660 = vrot.slane %v651, %v659
        %663 = vmatprep.subr.mxu0 %v588
        %664 = vmatpush1.msra.mxu0 %v587
        %665 = vmatprep.subr.mxu0 %v590
        %666 = vmatpush1.msra.mxu0 %v589
        %667 = vmatprep.subr.mxu0 %v592
        %668 = vmatpush1.msra.mxu0 %v591
        %669 = vmatprep.subr.mxu0 %v594
        %670 = vmatpush1.msra.mxu0 %v593
        %671 = vmatprep.subr.mxu0 %v596
        %672 = vmatpush1.msra.mxu0 %v595
        %673 = vmatprep.subr.mxu0 %v598
        %674 = vmatpush1.msra.mxu0 %v597
        %675 = vmatprep.subr.mxu0 %v600
        %676 = vmatpush1.msra.mxu0 %v599
        %677 = vmatprep.subr.mxu0 %v602
        %678 = vmatpush1.msra.mxu0 %v601
        %679 = vmatprep.subr.mxu0 %v604
        %680 = vmatpush1.msra.mxu0 %v603
        %681 = vmatprep.subr.mxu0 %v606
        %682 = vmatpush1.msra.mxu0 %v605
        %683 = vmatprep.subr.mxu0 %v608
        %684 = vmatpush1.msra.mxu0 %v607
        %685 = vmatprep.subr.mxu0 %v610
        %686 = vmatpush1.msra.mxu0 %v609
        %687 = vmatprep.subr.mxu0 %v612
        %688 = vmatpush1.msra.mxu0 %v611
        %689 = vmatprep.subr.mxu0 %v614
        %690 = vmatpush1.msra.mxu0 %v613
        %691 = vmatprep.subr.mxu0 %v616
        %692 = vmatpush1.msra.mxu0 %v615
        %693 = vmatprep.subr.mxu0 %v618
        %694 = vmatpush1.msra.mxu0 %v617
        %695 = vmatprep.subr.mxu0 %v620
        %696 = vmatpush1.msra.mxu0 %v619
        %697 = vmatprep.subr.mxu0 %v622
        %698 = vmatpush1.msra.mxu0 %v621
        %699 = vmatprep.subr.mxu0 %v624
        %700 = vmatpush1.msra.mxu0 %v623
        %701 = vmatprep.subr.mxu0 %v626
        %702 = vmatpush1.msra.mxu0 %v625
        %703 = vmatprep.subr.mxu0 %v628
        %704 = vmatpush1.msra.mxu0 %v627
        %705 = vmatprep.subr.mxu0 %v630
        %706 = vmatpush1.msra.mxu0 %v629
        %707 = vmatprep.subr.mxu0 %v632
        %708 = vmatpush1.msra.mxu0 %v631
        %709 = vmatprep.subr.mxu0 %v634
        %710 = vmatpush1.msra.mxu0 %v633
        %711 = vmatprep.subr.mxu0 %v636
        %712 = vmatpush1.msra.mxu0 %v635
        %713 = vmatprep.subr.mxu0 %v638
        %714 = vmatpush1.msra.mxu0 %v637
        %715 = vmatprep.subr.mxu0 %v640
        %716 = vmatpush1.msra.mxu0 %v639
        %717 = vmatprep.subr.mxu0 %v642
        %718 = vmatpush1.msra.mxu0 %v641
        %719 = vmatprep.subr.mxu0 %v644
        %720 = vmatpush1.msra.mxu0 %v643
        %721 = vmatprep.subr.mxu0 %v646
        %722 = vmatpush1.msra.mxu0 %v645
        %723 = vmatprep.subr.mxu0 %v648
        %724 = vmatpush1.msra.mxu0 %v647
        %725 = vmatprep.subr.mxu0 %v650
        %726 = vmatpush1.msra.mxu0 %v649
        %727 = vmatprep.mubr.f32.mxu0 %v586
        %728 = vmatmul.mubr.f32.gmra.mrb[0].mxu0 %v585
        %v729 = vpop.f32.mrb[0].mxu0
        %v730 = vadd.f32 %v656, %v729
        %v731 = vpop.f32.mrb[0].mxu0
        %v732 = vadd.f32 %v660, %v731
        %733 = vdwg.mxu0
        %v734 = vadd.f32 %v730, %v732
        %735 = vadd.xlane.f32.xlu0 %v734
        %v736 = vpop.xlane.xlu0 %735
        %v737 = vmul.f32 %v736, 0.00390625
        %v738 = vsub.f32 %v730, %v737
        %v739 = vsub.f32 %v732, %v737
        %v740 = vmul.f32 %v738, %v738
        %v741 = vmul.f32 %v739, %v739
        %v742 = vadd.f32 %v740, %v741
        %743 = vadd.xlane.f32.xlu0 %v742
        %v744 = vpop.xlane.xlu0 %743
        %v745 = vmul.f32 %v744, 0.00390625
        %v746 = vadd.f32 %v745, 1e-05
        %v747 = vrsqrt.pop %v746
        %v748 = vmul.f32 %v738, %v747
        %v749 = vmul.f32 %v739, %v747
        %v750 = vld [vmem:[%s5] sm:$0x3]
        %v752 = vlaneseq
        %v753 = vshrl.u32 %v752, 7
        %v754 = vsub.s32 0, %v753
        %v755 = vrot.slane %v750, %v754
        %v756 = vlaneseq
        %v757 = vshrl.u32 %v756, 7
        %v758 = vsub.s32 1, %v757
        %v759 = vrot.slane %v750, %v758
        %v762 = vmul.f32 %v748, %v755
        %v763 = vmul.f32 %v749, %v759
        %v764 = vld [vmem:[%s6] sm:$0x3]
        %v766 = vlaneseq
        %v767 = vshrl.u32 %v766, 7
        %v768 = vsub.s32 0, %v767
        %v769 = vrot.slane %v764, %v768
        %v770 = vlaneseq
        %v771 = vshrl.u32 %v770, 7
        %v772 = vsub.s32 1, %v771
        %v773 = vrot.slane %v764, %v772
        %v776 = vadd.f32 %v762, %v769
        %v777 = vadd.f32 %v763, %v773
        %778 = vst [vmem:[%s323] sm:$0xff] %v776
        %779 = vst [vmem:[%s323 + $0x8] sm:$0xff] %v777
        %s780 = sand.u32 %s185, 1
        %s781 = scalar_lea.sflag [#allocation5], %s780
        %s782 = sand.u32 %s185, 1
        %s783 = smul.addr %s782, 16
        %s784 = scalar_lea.vmem [#allocation9], %s783
        // Predicated region
        $region61: #{tpu_custom_call.1} parent=47 // pred_check
          %p785 = pneg %p195
        $region62: #{tpu_custom_call.1} parent=47 // pred_check_branch
          %787 = sbr.rel (%p785) target = $region64
        $region63: #{tpu_custom_call.1} parent=47 // pred_region
          %s789 = ssub.s32 256, 256
          %790 = vsyncadd %s781, %s789
          %s791 = smul.addr %s25, 2
          %s792 = smul.addr %s791, 128
          %s793 = scalar_lea.hbm %s7, %s792
          %s795 = sshll.u32 %s784, 4
          %s796 = int_to_ptr.vmem [resolvable:$true] %s795
          %798 = dma.vmem_to_hbm [thread:$0]  %s796, 256, %s793, %s781
        $region64: #{tpu_custom_call.1} parent=47 // pred_fallthru
          _
      $region48: #{tpu_custom_call.1} parent=5 // pred_fallthru
        _
      %p799 = scmp.le.s32.totalorder 2, %s20
      // Predicated region
      $region65: #{tpu_custom_call.1} parent=5 // pred_check
        %p800 = pneg %p799
      $region66: #{tpu_custom_call.1} parent=5 // pred_check_branch
        %802 = sbr.rel (%p800) target = $region68
      $region67: #{tpu_custom_call.1} parent=5 // pred_region
        %s803 = ssub.s32 %s20, 2
        // Predicated region
        $region69: #{tpu_custom_call.1} parent=67 // pred_check
          %p804 = pneg %p201
        $region70: #{tpu_custom_call.1} parent=67 // pred_check_branch
          %806 = sbr.rel (%p804) target = $region72
        $region71: #{tpu_custom_call.1} parent=67 // pred_region
          %s807 = sand.u32 %s186, 1
          %s808 = scalar_lea.sflag [#allocation5], %s807
          %s809 = sand.u32 %s186, 1
          %s810 = smul.addr %s809, 16
          %s811 = scalar_lea.vmem [#allocation9], %s810
          %812 = dma.done %s808, 256
        $region72: #{tpu_custom_call.1} parent=67 // pred_fallthru
          _
      $region68: #{tpu_custom_call.1} parent=5 // pred_fallthru
        _
    $region6: #{tpu_custom_call.1} parent=1 // loop_footer
      %s24 = sadd.s32 1, %s20
    $region7: #{tpu_custom_call.1} parent=1 // loop_footer_branch
      %19 = sbr.rel target = $region3
    $region8: #{tpu_custom_call.1} parent=1 // loop_exit
      _
    %813 = vsyncpa [#allocation4], 1
    %s814 = scalar_lea.sflag [#allocation4], 1
    %815 = vsyncpa %s814, 1
    %816 = vsyncpa [#allocation7], 1
    %817 = vsyncpa [#allocation5], 1
    %s818 = scalar_lea.sflag [#allocation5], 1
    %819 = vsyncpa %s818, 1

</llo_original>
